<compile_context>
chip_gen: v7x
topology: tpu7x:2x2x1
jax: 0.10.0
libtpu: 0.0.40
codegen_flags: <defaults>
</compile_context>

<pallas_src>
import functools

import jax
import jax.numpy as jnp
from jax.experimental import pallas as pl
from jax.experimental.pallas import tpu as pltpu


# ----------------------------------------------------------------------------
# Fused TemporalBlock kernel (one batch element per grid step)
# ----------------------------------------------------------------------------
def _temporal_block_kernel(*refs, dilation, ksize, has_downsample):
    """relu( relu(conv2(relu(conv1(x)+b1))+b2) + residual ), chomp fused away.

    refs (in order):
      x     : (1, C_in, L)
      w1    : (K, C_out, C_in)    b1 : (C_out, 1)
      w2    : (K, C_out, C_out)   b2 : (C_out, 1)
      [wd   : (C_out, C_in)       bd : (C_out, 1)]   iff has_downsample
      out   : (1, C_out, L)
      xpad  : VMEM scratch (C_in,  L + pad)
      hpad  : VMEM scratch (C_out, L + pad)
    """
    if has_downsample:
        (x_ref, w1_ref, b1_ref, w2_ref, b2_ref, wd_ref, bd_ref,
         o_ref, xpad_ref, hpad_ref) = refs
    else:
        (x_ref, w1_ref, b1_ref, w2_ref, b2_ref,
         o_ref, xpad_ref, hpad_ref) = refs
        wd_ref = bd_ref = None

    pad = dilation * (ksize - 1)
    c_in = x_ref.shape[1]
    c_out, l = o_ref.shape[1], o_ref.shape[2]

    def causal_conv(slab_ref, w_ref):
        # slab_ref holds [zeros(pad) | activation], shape (C, L + pad).
        # Tap k reads the window starting at k*d -> exactly the L causal outputs.
        slab = slab_ref[...]
        acc = jnp.zeros((c_out, l), jnp.float32)
        for k in range(ksize):                       # K is tiny -> static unroll
            acc = acc + jnp.dot(
                w_ref[k], slab[:, k * dilation : k * dilation + l],
                preferred_element_type=jnp.float32)
        return acc

    # ---- conv1 + bias + ReLU (chomp fused away) ----
    if pad > 0:
        xpad_ref[:, pl.ds(0, pad)] = jnp.zeros((c_in, pad), xpad_ref.dtype)
    xpad_ref[:, pl.ds(pad, l)] = x_ref[0]
    h1 = jnp.maximum(causal_conv(xpad_ref, w1_ref) + b1_ref[...], 0.0)
    # TODO(synk): dropout1 = identity (inference)

    # ---- conv2 + bias + ReLU ----
    if pad > 0:
        hpad_ref[:, pl.ds(0, pad)] = jnp.zeros((c_out, pad), hpad_ref.dtype)
    hpad_ref[:, pl.ds(pad, l)] = h1.astype(hpad_ref.dtype)
    h2 = jnp.maximum(causal_conv(hpad_ref, w2_ref) + b2_ref[...], 0.0)
    # TODO(synk): dropout2 = identity (inference)

    # ---- residual (optionally fused 1x1 downsample) + final ReLU ----
    if has_downsample:
        res = jnp.dot(wd_ref[...], x_ref[0],
                      preferred_element_type=jnp.float32) + bd_ref[...]
    else:
        res = x_ref[0].astype(jnp.float32)
    o_ref[0] = jnp.maximum(h2 + res, 0.0).astype(o_ref.dtype)


# ----------------------------------------------------------------------------
# pallas_call wrapper for one TemporalBlock
# ----------------------------------------------------------------------------
def temporal_block_forward(x, lp, dilation, kernel_size):
    n, c_in, l = x.shape
    k = kernel_size
    c_out = lp["w1"].shape[1]
    pad = dilation * (k - 1)
    has_ds = lp["wd"] is not None

    kern = functools.partial(_temporal_block_kernel, dilation=dilation,
                             ksize=k, has_downsample=has_ds)

    in_specs = [
        pl.BlockSpec((1, c_in, l), lambda i: (i, 0, 0)),       # x (per batch elem)
        pl.BlockSpec((k, c_out, c_in), lambda i: (0, 0, 0)),   # w1
        pl.BlockSpec((c_out, 1), lambda i: (0, 0)),            # b1
        pl.BlockSpec((k, c_out, c_out), lambda i: (0, 0, 0)),  # w2
        pl.BlockSpec((c_out, 1), lambda i: (0, 0)),            # b2
    ]
    args = [x, lp["w1"], lp["b1"], lp["w2"], lp["b2"]]
    if has_ds:
        in_specs += [pl.BlockSpec((c_out, c_in), lambda i: (0, 0)),   # wd
                     pl.BlockSpec((c_out, 1), lambda i: (0, 0))]      # bd
        args += [lp["wd"], lp["bd"]]

    itemsize = jnp.dtype(x.dtype).itemsize
    flops = 2 * n * l * (k * c_in * c_out + k * c_out * c_out
                         + (c_in * c_out if has_ds else 0))
    bytes_accessed = int(n * l * (c_in + c_out) * itemsize
                         + (k * c_out * (c_in + c_out) + 2 * c_out) * 4)

    return pl.pallas_call(
        kern,
        out_shape=jax.ShapeDtypeStruct((n, c_out, l), x.dtype),
        grid=(n,),
        in_specs=in_specs,
        out_specs=pl.BlockSpec((1, c_out, l), lambda i: (i, 0, 0)),
        scratch_shapes=[
            pltpu.VMEM((c_in, l + pad), x.dtype),    # [zeros | x] causal slab
            pltpu.VMEM((c_out, l + pad), x.dtype),   # [zeros | h1] causal slab
        ],
        compiler_params=pltpu.CompilerParams(
            dimension_semantics=("parallel",)),
        cost_estimate=pl.CostEstimate(flops=flops, transcendentals=0,
                                      bytes_accessed=bytes_accessed),
    )(*args)


def temporal_conv_net(x, params, kernel_size):
    h = x
    for i, lp in enumerate(params):
        h = temporal_block_forward(h, lp, 2 ** i, kernel_size)
    return h


# ----------------------------------------------------------------------------
# Parameters: weight_norm folded + kernel layout fixed once (hoisted)
# ----------------------------------------------------------------------------
def _weight_norm_effective(v, g):
    """PyTorch weight_norm (dim=0): W = g * V / ||V||, norm over (C_in, K)."""
    norm = jnp.sqrt(jnp.sum(v * v, axis=(1, 2), keepdims=True))
    return g.reshape(-1, 1, 1) * v / norm


def init_params(key, num_inputs, num_channels, kernel_size):
    params = []
    c_in = num_inputs
    for c_out in num_channels:
        key, k1, k2, k3, k4, k5, k6, k7, k8 = jax.random.split(key, 9)
        v1 = 0.01 * jax.random.normal(k1, (c_out, c_in, kernel_size), jnp.float32)
        g1 = 1.0 + 0.1 * jax.random.normal(k2, (c_out,), jnp.float32)
        b1 = 0.05 * jax.random.normal(k3, (c_out,), jnp.float32)
        v2 = 0.01 * jax.random.normal(k4, (c_out, c_out, kernel_size), jnp.float32)
        g2 = 1.0 + 0.1 * jax.random.normal(k5, (c_out,), jnp.float32)
        b2 = 0.05 * jax.random.normal(k6, (c_out,), jnp.float32)
        w1 = _weight_norm_effective(v1, g1)          # (C_out, C_in, K)
        w2 = _weight_norm_effective(v2, g2)
        if c_in != c_out:
            wd = 0.01 * jax.random.normal(k7, (c_out, c_in), jnp.float32)
            bd = 0.05 * jax.random.normal(k8, (c_out,), jnp.float32)
        else:
            wd, bd = None, None
        # Kernel layout, computed ONCE: weights (K, C_out, C_in), biases (C_out, 1).
        params.append(dict(
            w1=jnp.transpose(w1, (2, 0, 1)), b1=b1.reshape(c_out, 1),
            w2=jnp.transpose(w2, (2, 0, 1)), b2=b2.reshape(c_out, 1),
            wd=wd, bd=None if bd is None else bd.reshape(c_out, 1),
        ))
        c_in = c_out
    return params


# ----------------------------------------------------------------------------
# Pure-JAX reference (mirrors PyTorch forward semantics)
# ----------------------------------------------------------------------------
def _ref_causal_conv(x, w_kio, b, dilation):
    w = jnp.transpose(w_kio, (1, 2, 0))              # (C_out, C_in, K) "OIH"
    k = w.shape[-1]
    pad = dilation * (k - 1)
    y = jax.lax.conv_general_dilated(
        x, w, window_strides=(1,), padding=[(pad, 0)],
        rhs_dilation=(dilation,), dimension_numbers=("NCH", "OIH", "NCH"))
    return y + b.reshape(1, -1, 1)


def _ref_temporal_block(x, lp, dilation):
    h = jax.nn.relu(_ref_causal_conv(x, lp["w1"], lp["b1"], dilation))
    h = jax.nn.relu(_ref_causal_conv(h, lp["w2"], lp["b2"], dilation))
    if lp["wd"] is None:
        res = x
    else:
        res = jnp.einsum("oc,ncl->nol", lp["wd"], x) + lp["bd"].reshape(1, -1, 1)
    return jax.nn.relu(h + res)


# ----------------------------------------------------------------------------
if __name__ == "__main__":
    key = jax.random.PRNGKey(0)
    N, num_inputs, L = 2, 4, 16
    num_channels = (8, 8)      # layer 0: 4->8 (downsample path), layer 1: 8->8 (identity)
    kernel_size = 2

    key, kx, kp = jax.random.split(key, 3)
    x = jax.random.normal(kx, (N, num_inputs, L), dtype=jnp.float32)
    params = init_params(kp, num_inputs, num_channels, kernel_size)

    y = temporal_conv_net(x, params, kernel_size)
    y = jax.block_until_ready(y)

    # Reference check
    y_ref = x
    for i, lp in enumerate(params):
        y_ref = _ref_temporal_block(y_ref, lp, 2 ** i)

    assert y.shape == (N, num_channels[-1], L), y.shape
    assert y.dtype == x.dtype
    max_err = float(jnp.max(jnp.abs(y - y_ref)))
    assert jnp.allclose(y, y_ref, rtol=1e-4, atol=1e-5), f"max abs err {max_err}"

    print("KERNEL_OK")
</pallas_src>

<mosaic_0001>
module attributes {stable_mosaic.version = 11 : i64} {
  func.func @_temporal_block_kernel(%arg0: i32, %arg1: memref<1x4x16xf32, #tpu.memory_space<vmem>>, %arg2: memref<2x8x4xf32, #tpu.memory_space<vmem>>, %arg3: memref<8x1xf32, #tpu.memory_space<vmem>>, %arg4: memref<2x8x8xf32, #tpu.memory_space<vmem>>, %arg5: memref<8x1xf32, #tpu.memory_space<vmem>>, %arg6: memref<8x4xf32, #tpu.memory_space<vmem>>, %arg7: memref<8x1xf32, #tpu.memory_space<vmem>>, %arg8: memref<1x8x16xf32, #tpu.memory_space<vmem>>, %arg9: memref<4x17xf32, #tpu.memory_space<vmem>>, %arg10: memref<8x17xf32, #tpu.memory_space<vmem>>) attributes {dimension_semantics = [#tpu.dimension_semantics<parallel>], iteration_bounds = array<i64: 2>, scalar_prefetch = 0 : i64, scratch_operands = 2 : i64, tpu.core_type = #tpu.core_type<tc>, window_params = [{transform_indices = @transform_0, window_bounds = array<i64: 1, 4, 16>}, {pipeline_mode = #tpu.pipeline_mode<synchronous>, transform_indices = @transform_1, window_bounds = array<i64: 2, 8, 4>}, {pipeline_mode = #tpu.pipeline_mode<synchronous>, transform_indices = @transform_2, window_bounds = array<i64: 8, 1>}, {pipeline_mode = #tpu.pipeline_mode<synchronous>, transform_indices = @transform_3, window_bounds = array<i64: 2, 8, 8>}, {pipeline_mode = #tpu.pipeline_mode<synchronous>, transform_indices = @transform_4, window_bounds = array<i64: 8, 1>}, {pipeline_mode = #tpu.pipeline_mode<synchronous>, transform_indices = @transform_5, window_bounds = array<i64: 8, 4>}, {pipeline_mode = #tpu.pipeline_mode<synchronous>, transform_indices = @transform_6, window_bounds = array<i64: 8, 1>}, {transform_indices = @transform_7, window_bounds = array<i64: 1, 8, 16>}]} {
    %cst = arith.constant 0.000000e+00 : f32
    %0 = vector.broadcast %cst : f32 to vector<4x1xf32>
    %c0 = arith.constant 0 : index
    %c0_0 = arith.constant 0 : index
    %1 = vector.load %arg9[%c0, %c0_0] : memref<4x17xf32, #tpu.memory_space<vmem>>, vector<4x1xf32>
    tpu.vector_store %arg9[%c0, %c0_0], %0 {strides = array<i32>} : memref<4x17xf32, #tpu.memory_space<vmem>>, vector<4x1xf32>,
    %c0_1 = arith.constant 0 : index
    %c0_2 = arith.constant 0 : index
    %c0_3 = arith.constant 0 : index
    %2 = vector.load %arg1[%c0_1, %c0_2, %c0_3] : memref<1x4x16xf32, #tpu.memory_space<vmem>>, vector<1x4x16xf32>
    %3 = vector.shape_cast %2 : vector<1x4x16xf32> to vector<4x16xf32>
    %c0_4 = arith.constant 0 : index
    %c1 = arith.constant 1 : index
    %4 = vector.load %arg9[%c0_4, %c1] : memref<4x17xf32, #tpu.memory_space<vmem>>, vector<4x16xf32>
    tpu.vector_store %arg9[%c0_4, %c1], %3 {strides = array<i32>} : memref<4x17xf32, #tpu.memory_space<vmem>>, vector<4x16xf32>,
    %c0_5 = arith.constant 0 : index
    %c0_6 = arith.constant 0 : index
    %5 = vector.load %arg9[%c0_5, %c0_6] : memref<4x17xf32, #tpu.memory_space<vmem>>, vector<4x17xf32>
    %cst_7 = arith.constant 0.000000e+00 : f32
    %6 = vector.broadcast %cst_7 : f32 to vector<8x16xf32>
    %c0_8 = arith.constant 0 : index
    %c0_9 = arith.constant 0 : index
    %c0_10 = arith.constant 0 : index
    %7 = vector.load %arg2[%c0_8, %c0_9, %c0_10] : memref<2x8x4xf32, #tpu.memory_space<vmem>>, vector<1x8x4xf32>
    %8 = vector.shape_cast %7 : vector<1x8x4xf32> to vector<8x4xf32>
    %9 = vector.extract_strided_slice %5 {offsets = [0, 0], sizes = [4, 16], strides = [1, 1]} : vector<4x17xf32> to vector<4x16xf32>
    %cst_11 = arith.constant dense<0.000000e+00> : vector<8x16xf32>
    %10 = tpu.matmul %8, %9, %cst_11 {dimension_numbers = #tpu.dot_dimension_numbers<[1], [0], [0], [1], [0, 0, 1, 1], [], []>} : vector<8x4xf32>, vector<4x16xf32>, vector<8x16xf32> -> vector<8x16xf32>
    %11 = arith.addf %6, %10 : vector<8x16xf32>
    %c1_12 = arith.constant 1 : index
    %c0_13 = arith.constant 0 : index
    %c0_14 = arith.constant 0 : index
    %12 = vector.load %arg2[%c1_12, %c0_13, %c0_14] : memref<2x8x4xf32, #tpu.memory_space<vmem>>, vector<1x8x4xf32>
    %13 = vector.shape_cast %12 : vector<1x8x4xf32> to vector<8x4xf32>
    %14 = vector.extract_strided_slice %5 {offsets = [0, 1], sizes = [4, 16], strides = [1, 1]} : vector<4x17xf32> to vector<4x16xf32>
    %cst_15 = arith.constant dense<0.000000e+00> : vector<8x16xf32>
    %15 = tpu.matmul %13, %14, %cst_15 {dimension_numbers = #tpu.dot_dimension_numbers<[1], [0], [0], [1], [0, 0, 1, 1], [], []>} : vector<8x4xf32>, vector<4x16xf32>, vector<8x16xf32> -> vector<8x16xf32>
    %16 = arith.addf %11, %15 : vector<8x16xf32>
    %c0_16 = arith.constant 0 : index
    %c0_17 = arith.constant 0 : index
    %17 = vector.load %arg3[%c0_16, %c0_17] : memref<8x1xf32, #tpu.memory_space<vmem>>, vector<8x1xf32>
    %18 = vector.broadcast %17 : vector<8x1xf32> to vector<8x16xf32>
    %19 = arith.addf %16, %18 : vector<8x16xf32>
    %cst_18 = arith.constant 0.000000e+00 : f32
    %20 = vector.broadcast %cst_18 : f32 to vector<8x16xf32>
    %21 = arith.maximumf %19, %20 : vector<8x16xf32>
    %cst_19 = arith.constant 0.000000e+00 : f32
    %22 = vector.broadcast %cst_19 : f32 to vector<8x1xf32>
    %c0_20 = arith.constant 0 : index
    %c0_21 = arith.constant 0 : index
    %23 = vector.load %arg10[%c0_20, %c0_21] : memref<8x17xf32, #tpu.memory_space<vmem>>, vector<8x1xf32>
    tpu.vector_store %arg10[%c0_20, %c0_21], %22 {strides = array<i32>} : memref<8x17xf32, #tpu.memory_space<vmem>>, vector<8x1xf32>,
    %c0_22 = arith.constant 0 : index
    %c1_23 = arith.constant 1 : index
    %24 = vector.load %arg10[%c0_22, %c1_23] : memref<8x17xf32, #tpu.memory_space<vmem>>, vector<8x16xf32>
    tpu.vector_store %arg10[%c0_22, %c1_23], %21 {strides = array<i32>} : memref<8x17xf32, #tpu.memory_space<vmem>>, vector<8x16xf32>,
    %c0_24 = arith.constant 0 : index
    %c0_25 = arith.constant 0 : index
    %25 = vector.load %arg10[%c0_24, %c0_25] : memref<8x17xf32, #tpu.memory_space<vmem>>, vector<8x17xf32>
    %cst_26 = arith.constant 0.000000e+00 : f32
    %26 = vector.broadcast %cst_26 : f32 to vector<8x16xf32>
    %c0_27 = arith.constant 0 : index
    %c0_28 = arith.constant 0 : index
    %c0_29 = arith.constant 0 : index
    %27 = vector.load %arg4[%c0_27, %c0_28, %c0_29] : memref<2x8x8xf32, #tpu.memory_space<vmem>>, vector<1x8x8xf32>
    %28 = vector.shape_cast %27 : vector<1x8x8xf32> to vector<8x8xf32>
    %29 = vector.extract_strided_slice %25 {offsets = [0, 0], sizes = [8, 16], strides = [1, 1]} : vector<8x17xf32> to vector<8x16xf32>
    %cst_30 = arith.constant dense<0.000000e+00> : vector<8x16xf32>
    %30 = tpu.matmul %28, %29, %cst_30 {dimension_numbers = #tpu.dot_dimension_numbers<[1], [0], [0], [1], [0, 0, 1, 1], [], []>} : vector<8x8xf32>, vector<8x16xf32>, vector<8x16xf32> -> vector<8x16xf32>
    %31 = arith.addf %26, %30 : vector<8x16xf32>
    %c1_31 = arith.constant 1 : index
    %c0_32 = arith.constant 0 : index
    %c0_33 = arith.constant 0 : index
    %32 = vector.load %arg4[%c1_31, %c0_32, %c0_33] : memref<2x8x8xf32, #tpu.memory_space<vmem>>, vector<1x8x8xf32>
    %33 = vector.shape_cast %32 : vector<1x8x8xf32> to vector<8x8xf32>
    %34 = vector.extract_strided_slice %25 {offsets = [0, 1], sizes = [8, 16], strides = [1, 1]} : vector<8x17xf32> to vector<8x16xf32>
    %cst_34 = arith.constant dense<0.000000e+00> : vector<8x16xf32>
    %35 = tpu.matmul %33, %34, %cst_34 {dimension_numbers = #tpu.dot_dimension_numbers<[1], [0], [0], [1], [0, 0, 1, 1], [], []>} : vector<8x8xf32>, vector<8x16xf32>, vector<8x16xf32> -> vector<8x16xf32>
    %36 = arith.addf %31, %35 : vector<8x16xf32>
    %c0_35 = arith.constant 0 : index
    %c0_36 = arith.constant 0 : index
    %37 = vector.load %arg5[%c0_35, %c0_36] : memref<8x1xf32, #tpu.memory_space<vmem>>, vector<8x1xf32>
    %38 = vector.broadcast %37 : vector<8x1xf32> to vector<8x16xf32>
    %39 = arith.addf %36, %38 : vector<8x16xf32>
    %cst_37 = arith.constant 0.000000e+00 : f32
    %40 = vector.broadcast %cst_37 : f32 to vector<8x16xf32>
    %41 = arith.maximumf %39, %40 : vector<8x16xf32>
    %c0_38 = arith.constant 0 : index
    %c0_39 = arith.constant 0 : index
    %42 = vector.load %arg6[%c0_38, %c0_39] : memref<8x4xf32, #tpu.memory_space<vmem>>, vector<8x4xf32>
    %c0_40 = arith.constant 0 : index
    %c0_41 = arith.constant 0 : index
    %c0_42 = arith.constant 0 : index
    %43 = vector.load %arg1[%c0_40, %c0_41, %c0_42] : memref<1x4x16xf32, #tpu.memory_space<vmem>>, vector<1x4x16xf32>
    %44 = vector.shape_cast %43 : vector<1x4x16xf32> to vector<4x16xf32>
    %cst_43 = arith.constant dense<0.000000e+00> : vector<8x16xf32>
    %45 = tpu.matmul %42, %44, %cst_43 {dimension_numbers = #tpu.dot_dimension_numbers<[1], [0], [0], [1], [0, 0, 1, 1], [], []>} : vector<8x4xf32>, vector<4x16xf32>, vector<8x16xf32> -> vector<8x16xf32>
    %c0_44 = arith.constant 0 : index
    %c0_45 = arith.constant 0 : index
    %46 = vector.load %arg7[%c0_44, %c0_45] : memref<8x1xf32, #tpu.memory_space<vmem>>, vector<8x1xf32>
    %47 = vector.broadcast %46 : vector<8x1xf32> to vector<8x16xf32>
    %48 = arith.addf %45, %47 : vector<8x16xf32>
    %49 = arith.addf %41, %48 : vector<8x16xf32>
    %cst_46 = arith.constant 0.000000e+00 : f32
    %50 = vector.broadcast %cst_46 : f32 to vector<8x16xf32>
    %51 = arith.maximumf %49, %50 : vector<8x16xf32>
    %c0_47 = arith.constant 0 : index
    %c0_48 = arith.constant 0 : index
    %c0_49 = arith.constant 0 : index
    %52 = vector.load %arg8[%c0_47, %c0_48, %c0_49] : memref<1x8x16xf32, #tpu.memory_space<vmem>>, vector<1x8x16xf32>
    %53 = vector.shape_cast %52 : vector<1x8x16xf32> to vector<8x16xf32>
    %54 = vector.shape_cast %51 : vector<8x16xf32> to vector<1x8x16xf32>
    tpu.vector_store %arg8[%c0_47, %c0_48, %c0_49], %54 {strides = array<i32>} : memref<1x8x16xf32, #tpu.memory_space<vmem>>, vector<1x8x16xf32>,
    return
  }
  func.func @transform_0(%arg0: i32) -> (i32, i32, i32) {
    %c0_i32 = arith.constant 0 : i32
    %c0_i32_0 = arith.constant 0 : i32
    %c0_i32_1 = arith.constant 0 : i32
    return %arg0, %c0_i32, %c0_i32_0 : i32, i32, i32
  }
  func.func @transform_1(%arg0: i32) -> (i32, i32, i32) {
    %c0_i32 = arith.constant 0 : i32
    %c0_i32_0 = arith.constant 0 : i32
    %c0_i32_1 = arith.constant 0 : i32
    %c0_i32_2 = arith.constant 0 : i32
    return %c0_i32, %c0_i32_0, %c0_i32_1 : i32, i32, i32
  }
  func.func @transform_2(%arg0: i32) -> (i32, i32) {
    %c0_i32 = arith.constant 0 : i32
    %c0_i32_0 = arith.constant 0 : i32
    %c0_i32_1 = arith.constant 0 : i32
    return %c0_i32, %c0_i32_0 : i32, i32
  }
  func.func @transform_3(%arg0: i32) -> (i32, i32, i32) {
    %c0_i32 = arith.constant 0 : i32
    %c0_i32_0 = arith.constant 0 : i32
    %c0_i32_1 = arith.constant 0 : i32
    %c0_i32_2 = arith.constant 0 : i32
    return %c0_i32, %c0_i32_0, %c0_i32_1 : i32, i32, i32
  }
  func.func @transform_4(%arg0: i32) -> (i32, i32) {
    %c0_i32 = arith.constant 0 : i32
    %c0_i32_0 = arith.constant 0 : i32
    %c0_i32_1 = arith.constant 0 : i32
    return %c0_i32, %c0_i32_0 : i32, i32
  }
  func.func @transform_5(%arg0: i32) -> (i32, i32) {
    %c0_i32 = arith.constant 0 : i32
    %c0_i32_0 = arith.constant 0 : i32
    %c0_i32_1 = arith.constant 0 : i32
    return %c0_i32, %c0_i32_0 : i32, i32
  }
  func.func @transform_6(%arg0: i32) -> (i32, i32) {
    %c0_i32 = arith.constant 0 : i32
    %c0_i32_0 = arith.constant 0 : i32
    %c0_i32_1 = arith.constant 0 : i32
    return %c0_i32, %c0_i32_0 : i32, i32
  }
  func.func @transform_7(%arg0: i32) -> (i32, i32, i32) {
    %c0_i32 = arith.constant 0 : i32
    %c0_i32_0 = arith.constant 0 : i32
    %c0_i32_1 = arith.constant 0 : i32
    return %arg0, %c0_i32, %c0_i32_0 : i32, i32, i32
  }
}

</mosaic_0001>

<llo_original>
// kernel: tpu_custom_call.1
$region0: #{tpu_custom_call.1}
  #allocation0 [shape = 'u32[]', space=smem, size = 0x4, offset = 0x4, fixed_abs, tag = 'smem constant byte address 0x4 - core index']
  #allocation1 [shape = 'u32[144,128]{1,0:T(1,128)}', space=vmem, size = 0x12000, scoped, tag = 'internal scratch']
  #allocation2 [shape = 'f32[4,17]{1,0:T(4,128)}', space=vmem, size = 0x800, scoped, tag = 'scratch operand']
  #allocation3 [shape = 'f32[8,17]{1,0:T(8,128)}', space=vmem, size = 0x1000, scoped, tag = 'scratch operand']
  %s0 = inlined_call_operand.vmem [shape: f32[2,4,16], index: 0, kind: input, shape index: {}]
  %s1 = inlined_call_operand.vmem [shape: f32[2,8,4], index: 1, kind: input, shape index: {}]
  %s2 = inlined_call_operand.vmem [shape: f32[8,1], index: 2, kind: input, shape index: {}]
  %s3 = inlined_call_operand.vmem [shape: f32[2,8,8], index: 3, kind: input, shape index: {}]
  %s4 = inlined_call_operand.vmem [shape: f32[8,1], index: 4, kind: input, shape index: {}]
  %s5 = inlined_call_operand.vmem [shape: f32[8,4], index: 5, kind: input, shape index: {}]
  %s6 = inlined_call_operand.vmem [shape: f32[8,1], index: 6, kind: input, shape index: {}]
  %s7 = inlined_call_operand.hbm [shape: f32[2,8,16], index: 7, kind: output, shape index: {}]
  %s8 = sld [smem:[#allocation0]]
  $region61: #{tpu_custom_call.1} parent=0
    _
  %s10 = ssub.s32 1, %s8
  %s11 = scalar_select 0, %s10, %s8
  $region1: #{tpu_custom_call.1} parent=0
    #allocation4 [shape = 'u8[8192]{0}', space=vmem, size = 0x2000, scoped, tag = 'output window, operand 0']
    #allocation5 [shape = 's32[2]{0}', space=sflag, size = 0x8, scoped, tag = 'scoped memory for tpu_custom_call.1']
    %12 = vsyncpa [#allocation5], 0
    %s13 = scalar_lea.sflag [#allocation5], 1
    %14 = vsyncpa %s13, 0
    loop: start=0, step=1, limit=4
    $region2: #{tpu_custom_call.1} parent=1 // loop_pre_header
      _
    $region3: #{tpu_custom_call.1} parent=1 // loop_header
      %s16 = sphi 0, %s20
      %p17 = scmp.ge.s32.totalorder %s16, 4
      %s26 = sphi 0, %s28
      %s29 = sphi 0, %s26
      %s30 = sphi 0, %s29
      %s46 = sphi 0, %s30
      %s50 = sphi 0, %s50
      %s52 = sphi 0, %s50
      %s53 = sphi 0, %s52
      %s67 = sphi 0, %s53
      %s71 = sphi 0, %s71
      %s73 = sphi 0, %s71
      %s74 = sphi 0, %s73
      %s88 = sphi 0, %s74
      %s92 = sphi 0, %s92
      %s94 = sphi 0, %s92
      %s95 = sphi 0, %s94
      %s109 = sphi 0, %s95
      %s113 = sphi 0, %s113
      %s115 = sphi 0, %s113
      %s116 = sphi 0, %s115
      %s130 = sphi 0, %s116
      %s134 = sphi 0, %s134
      %s136 = sphi 0, %s134
      %s137 = sphi 0, %s136
      %s151 = sphi 0, %s137
      %s155 = sphi 0, %s155
      %s157 = sphi 0, %s155
      %s158 = sphi 0, %s157
      %s172 = sphi 0, %s158
      %s178 = sphi 0, %s180
      %s181 = sphi 0, %s178
      %s182 = sphi 0, %s181
      %s198 = sphi 0, %s182
    $region4: #{tpu_custom_call.1} parent=1 // loop_header_branch
      %19 = sbr.rel (%p17) target = $region8
    $region5: #{tpu_custom_call.1} parent=1 // loop_body
      %s21 = ssub.s32 %s16, 1
      %s22 = ssub.s32 %s16, 2
      %s23 = sadd.s32 %s16, 1
      %s24 = ssub.s32 %s16, %s23
      %p25 = scmp.eq.s32.totalorder %s24, 0
      %s27 = sadd.s32 %s26, 1
      %s28 = scalar_select %p25, %s26, %s27
      %p31 = pneg %p25
      %p32 = scmp.eq.s32.totalorder %s16, 1
      %p33 = por %p31, %p32
      %p34 = scmp.ne.s32.totalorder %s26, %s29
      %p35 = scmp.eq.s32.totalorder %s16, 0
      %p36 = por %p34, %p35
      %p37 = scmp.ne.s32.totalorder %s26, %s29
      %p38 = scmp.eq.s32.totalorder %s21, 1
      %p39 = por %p37, %p38
      %p40 = scmp.ne.s32.totalorder %s29, %s30
      %p41 = scmp.eq.s32.totalorder %s21, 0
      %p42 = por %p40, %p41
      %p43 = scmp.ne.s32.totalorder %s29, %s30
      %p44 = scmp.eq.s32.totalorder %s22, 1
      %p45 = por %p43, %p44
      %p47 = scmp.ne.s32.totalorder %s30, %s46
      %p48 = scmp.eq.s32.totalorder %s22, 0
      %p49 = por %p47, %p48
      %s51 = sadd.s32 %s50, 1
      %p54 = scmp.eq.s32.totalorder %s16, 1
      %p55 = scmp.ne.s32.totalorder %s50, %s52
      %p56 = scmp.eq.s32.totalorder %s16, 0
      %p57 = por %p55, %p56
      %p58 = scmp.ne.s32.totalorder %s50, %s52
      %p59 = scmp.eq.s32.totalorder %s21, 1
      %p60 = por %p58, %p59
      %p61 = scmp.ne.s32.totalorder %s52, %s53
      %p62 = scmp.eq.s32.totalorder %s21, 0
      %p63 = por %p61, %p62
      %p64 = scmp.ne.s32.totalorder %s52, %s53
      %p65 = scmp.eq.s32.totalorder %s22, 1
      %p66 = por %p64, %p65
      %p68 = scmp.ne.s32.totalorder %s53, %s67
      %p69 = scmp.eq.s32.totalorder %s22, 0
      %p70 = por %p68, %p69
      %s72 = sadd.s32 %s71, 1
      %p75 = scmp.eq.s32.totalorder %s16, 1
      %p76 = scmp.ne.s32.totalorder %s71, %s73
      %p77 = scmp.eq.s32.totalorder %s16, 0
      %p78 = por %p76, %p77
      %p79 = scmp.ne.s32.totalorder %s71, %s73
      %p80 = scmp.eq.s32.totalorder %s21, 1
      %p81 = por %p79, %p80
      %p82 = scmp.ne.s32.totalorder %s73, %s74
      %p83 = scmp.eq.s32.totalorder %s21, 0
      %p84 = por %p82, %p83
      %p85 = scmp.ne.s32.totalorder %s73, %s74
      %p86 = scmp.eq.s32.totalorder %s22, 1
      %p87 = por %p85, %p86
      %p89 = scmp.ne.s32.totalorder %s74, %s88
      %p90 = scmp.eq.s32.totalorder %s22, 0
      %p91 = por %p89, %p90
      %s93 = sadd.s32 %s92, 1
      %p96 = scmp.eq.s32.totalorder %s16, 1
      %p97 = scmp.ne.s32.totalorder %s92, %s94
      %p98 = scmp.eq.s32.totalorder %s16, 0
      %p99 = por %p97, %p98
      %p100 = scmp.ne.s32.totalorder %s92, %s94
      %p101 = scmp.eq.s32.totalorder %s21, 1
      %p102 = por %p100, %p101
      %p103 = scmp.ne.s32.totalorder %s94, %s95
      %p104 = scmp.eq.s32.totalorder %s21, 0
      %p105 = por %p103, %p104
      %p106 = scmp.ne.s32.totalorder %s94, %s95
      %p107 = scmp.eq.s32.totalorder %s22, 1
      %p108 = por %p106, %p107
      %p110 = scmp.ne.s32.totalorder %s95, %s109
      %p111 = scmp.eq.s32.totalorder %s22, 0
      %p112 = por %p110, %p111
      %s114 = sadd.s32 %s113, 1
      %p117 = scmp.eq.s32.totalorder %s16, 1
      %p118 = scmp.ne.s32.totalorder %s113, %s115
      %p119 = scmp.eq.s32.totalorder %s16, 0
      %p120 = por %p118, %p119
      %p121 = scmp.ne.s32.totalorder %s113, %s115
      %p122 = scmp.eq.s32.totalorder %s21, 1
      %p123 = por %p121, %p122
      %p124 = scmp.ne.s32.totalorder %s115, %s116
      %p125 = scmp.eq.s32.totalorder %s21, 0
      %p126 = por %p124, %p125
      %p127 = scmp.ne.s32.totalorder %s115, %s116
      %p128 = scmp.eq.s32.totalorder %s22, 1
      %p129 = por %p127, %p128
      %p131 = scmp.ne.s32.totalorder %s116, %s130
      %p132 = scmp.eq.s32.totalorder %s22, 0
      %p133 = por %p131, %p132
      %s135 = sadd.s32 %s134, 1
      %p138 = scmp.eq.s32.totalorder %s16, 1
      %p139 = scmp.ne.s32.totalorder %s134, %s136
      %p140 = scmp.eq.s32.totalorder %s16, 0
      %p141 = por %p139, %p140
      %p142 = scmp.ne.s32.totalorder %s134, %s136
      %p143 = scmp.eq.s32.totalorder %s21, 1
      %p144 = por %p142, %p143
      %p145 = scmp.ne.s32.totalorder %s136, %s137
      %p146 = scmp.eq.s32.totalorder %s21, 0
      %p147 = por %p145, %p146
      %p148 = scmp.ne.s32.totalorder %s136, %s137
      %p149 = scmp.eq.s32.totalorder %s22, 1
      %p150 = por %p148, %p149
      %p152 = scmp.ne.s32.totalorder %s137, %s151
      %p153 = scmp.eq.s32.totalorder %s22, 0
      %p154 = por %p152, %p153
      %s156 = sadd.s32 %s155, 1
      %p159 = scmp.eq.s32.totalorder %s16, 1
      %p160 = scmp.ne.s32.totalorder %s155, %s157
      %p161 = scmp.eq.s32.totalorder %s16, 0
      %p162 = por %p160, %p161
      %p163 = scmp.ne.s32.totalorder %s155, %s157
      %p164 = scmp.eq.s32.totalorder %s21, 1
      %p165 = por %p163, %p164
      %p166 = scmp.ne.s32.totalorder %s157, %s158
      %p167 = scmp.eq.s32.totalorder %s21, 0
      %p168 = por %p166, %p167
      %p169 = scmp.ne.s32.totalorder %s157, %s158
      %p170 = scmp.eq.s32.totalorder %s22, 1
      %p171 = por %p169, %p170
      %p173 = scmp.ne.s32.totalorder %s158, %s172
      %p174 = scmp.eq.s32.totalorder %s22, 0
      %p175 = por %p173, %p174
      %s176 = ssub.s32 %s16, %s23
      %p177 = scmp.eq.s32.totalorder %s176, 0
      %s179 = sadd.s32 %s178, 1
      %s180 = scalar_select %p177, %s178, %s179
      %p183 = pneg %p177
      %p184 = scmp.eq.s32.totalorder %s16, 1
      %p185 = por %p183, %p184
      %p186 = scmp.ne.s32.totalorder %s178, %s181
      %p187 = scmp.eq.s32.totalorder %s16, 0
      %p188 = por %p186, %p187
      %p189 = scmp.ne.s32.totalorder %s178, %s181
      %p190 = scmp.eq.s32.totalorder %s21, 1
      %p191 = por %p189, %p190
      %p192 = scmp.ne.s32.totalorder %s181, %s182
      %p193 = scmp.eq.s32.totalorder %s21, 0
      %p194 = por %p192, %p193
      %p195 = scmp.ne.s32.totalorder %s181, %s182
      %p196 = scmp.eq.s32.totalorder %s22, 1
      %p197 = por %p195, %p196
      %p199 = scmp.ne.s32.totalorder %s182, %s198
      %p200 = scmp.eq.s32.totalorder %s22, 0
      %p201 = por %p199, %p200
      %p202 = scmp.le.s32.totalorder 1, %s16
      %p203 = scmp.lt.s32.totalorder %s16, 3
      %p204 = pnand %p202, %p203
      %p205 = pneg %p204
      // Predicated region
      $region9: #{tpu_custom_call.1} parent=5 // pred_check
        _
      $region10: #{tpu_custom_call.1} parent=5 // pred_check_branch
        %207 = sbr.rel (%p204) target = $region12
      $region11: #{tpu_custom_call.1} parent=5 // pred_region
        %s208 = ssub.s32 %s16, 1
        // Predicated region
        $region13: #{tpu_custom_call.1} parent=11 // pred_check
          %p209 = pneg %p63
        $region14: #{tpu_custom_call.1} parent=11 // pred_check_branch
          %211 = sbr.rel (%p209) target = $region16
        $region15: #{tpu_custom_call.1} parent=11 // pred_region
          _
        $region16: #{tpu_custom_call.1} parent=11 // pred_fallthru
          _
        // Predicated region
        $region17: #{tpu_custom_call.1} parent=11 // pred_check
          %p212 = pneg %p84
        $region18: #{tpu_custom_call.1} parent=11 // pred_check_branch
          %214 = sbr.rel (%p212) target = $region20
        $region19: #{tpu_custom_call.1} parent=11 // pred_region
          _
        $region20: #{tpu_custom_call.1} parent=11 // pred_fallthru
          _
        // Predicated region
        $region21: #{tpu_custom_call.1} parent=11 // pred_check
          %p215 = pneg %p105
        $region22: #{tpu_custom_call.1} parent=11 // pred_check_branch
          %217 = sbr.rel (%p215) target = $region24
        $region23: #{tpu_custom_call.1} parent=11 // pred_region
          _
        $region24: #{tpu_custom_call.1} parent=11 // pred_fallthru
          _
        // Predicated region
        $region25: #{tpu_custom_call.1} parent=11 // pred_check
          %p218 = pneg %p126
        $region26: #{tpu_custom_call.1} parent=11 // pred_check_branch
          %220 = sbr.rel (%p218) target = $region28
        $region27: #{tpu_custom_call.1} parent=11 // pred_region
          _
        $region28: #{tpu_custom_call.1} parent=11 // pred_fallthru
          _
        // Predicated region
        $region29: #{tpu_custom_call.1} parent=11 // pred_check
          %p221 = pneg %p147
        $region30: #{tpu_custom_call.1} parent=11 // pred_check_branch
          %223 = sbr.rel (%p221) target = $region32
        $region31: #{tpu_custom_call.1} parent=11 // pred_region
          _
        $region32: #{tpu_custom_call.1} parent=11 // pred_fallthru
          _
        // Predicated region
        $region33: #{tpu_custom_call.1} parent=11 // pred_check
          %p224 = pneg %p168
        $region34: #{tpu_custom_call.1} parent=11 // pred_check_branch
          %226 = sbr.rel (%p224) target = $region36
        $region35: #{tpu_custom_call.1} parent=11 // pred_region
          _
        $region36: #{tpu_custom_call.1} parent=11 // pred_fallthru
          _
      $region12: #{tpu_custom_call.1} parent=5 // pred_fallthru
        _
      %p227 = scmp.lt.s32.totalorder %s16, 2
      // Predicated region
      $region37: #{tpu_custom_call.1} parent=5 // pred_check
        %p228 = pneg %p227
      $region38: #{tpu_custom_call.1} parent=5 // pred_check_branch
        %230 = sbr.rel (%p228) target = $region40
      $region39: #{tpu_custom_call.1} parent=5 // pred_region
        // Predicated region
        $region41: #{tpu_custom_call.1} parent=39 // pred_check
          %p231 = pneg %p36
        $region42: #{tpu_custom_call.1} parent=39 // pred_check_branch
          %233 = sbr.rel (%p231) target = $region44
        $region43: #{tpu_custom_call.1} parent=39 // pred_region
          %p234 = scmp.lt.s32.totalorder %s16, 1
          %s235 = scalar_select %p234, %s16, 1
          %s236 = smul.addr %s235, 4
          %s237 = scalar_lea.vmem %s0, %s236
        $region44: #{tpu_custom_call.1} parent=39 // pred_fallthru
          _
      $region40: #{tpu_custom_call.1} parent=5 // pred_fallthru
        _
      %p238 = scmp.le.s32.totalorder 1, %s16
      %p239 = scmp.lt.s32.totalorder %s16, 3
      %p240 = pnand %p238, %p239
      %p241 = pneg %p240
      // Predicated region
      $region45: #{tpu_custom_call.1} parent=5 // pred_check
        _
      $region46: #{tpu_custom_call.1} parent=5 // pred_check_branch
        %243 = sbr.rel (%p240) target = $region48
      $region47: #{tpu_custom_call.1} parent=5 // pred_region
        %s244 = ssub.s32 %s16, 1
        %p245 = scmp.lt.s32.totalorder %s21, 1
        %s246 = scalar_select %p245, %s21, 1
        %s247 = smul.addr %s246, 4
        %s248 = scalar_lea.vmem %s0, %s247
        %p249 = pneg %p42
        %p250 = pneg %p39
        %p251 = pneg %p63
        %p252 = pneg %p60
        %p253 = pneg %p84
        %p254 = pneg %p81
        %p255 = pneg %p105
        %p256 = pneg %p102
        %p257 = pneg %p126
        %p258 = pneg %p123
        %p259 = pneg %p147
        %p260 = pneg %p144
        %p261 = pneg %p168
        %p262 = pneg %p165
        %p263 = pneg %p194
        %p264 = pneg %p191
        %s265 = sand.u32 %s181, 1
        %s266 = scalar_lea.sflag [#allocation5], %s265
        %s267 = sand.u32 %s181, 1
        %s268 = smul.addr %s267, 8
        %s269 = scalar_lea.vmem [#allocation4], %s268
        %p270 = scmp.lt.s32.totalorder %s21, 1
        %s271 = scalar_select %p270, %s21, 1
        %s272 = smul.addr %s271, 4
        %s273 = scalar_lea.vmem %s0, %s272
        %vm274 = vcmask 3072
        %275 = vst.msk [vmem:[#allocation2] sm:$0xf] %vm274, 0.0
        %v276 = vld [vmem:[%s273] sm:$0xf]
        %278 = vrot.lane.b32.xlu0 %v276, 1
        %v279 = vpop.permute.xlu0 %278
        %vm281 = vcmask 134152
        %282 = vst.msk [vmem:[#allocation2] sm:$0xf] %vm281, %v279
        %v283 = vld [vmem:[#allocation2] sm:$0xf]
        %v284 = vld [vmem:[%s1] sm:$0xff]
        %s285 = scalar_lea.vmem %s1, 8
        %v286 = vld [vmem:[%s285] sm:$0xff]
        %288 = vrot.lane.b32.xlu0 %v283, 127
        %v289 = vpop.permute.xlu0 %288
        %vm290 = vcmask 31744
        %v292 = vsel %vm290, %v286, 0
        %vm294 = vcmask 1043456
        %v295 = vsel %vm294, %v289, 0
        %297 = vmatprep.subr.mxu0 0.0
        %298 = vmatpush1.msra.mxu0 %v295
        %299 = vmatprep.subr.mxu0 0.0
        %300 = vmatpush1.msra.mxu0 0.0
        %301 = vmatprep.subr.mxu0 0.0
        %302 = vmatpush1.msra.mxu0 0.0
        %303 = vmatprep.subr.mxu0 0.0
        %304 = vmatpush1.msra.mxu0 0.0
        %305 = vmatprep.subr.mxu0 0.0
        %306 = vmatpush1.msra.mxu0 0.0
        %307 = vmatprep.subr.mxu0 0.0
        %308 = vmatpush1.msra.mxu0 0.0
        %309 = vmatprep.subr.mxu0 0.0
        %310 = vmatpush1.msra.mxu0 0.0
        %311 = vmatprep.subr.mxu0 0.0
        %312 = vmatpush1.msra.mxu0 0.0
        %313 = vmatprep.subr.mxu0 0.0
        %314 = vmatpush1.msra.mxu0 0.0
        %315 = vmatprep.subr.mxu0 0.0
        %316 = vmatpush1.msra.mxu0 0.0
        %317 = vmatprep.subr.mxu0 0.0
        %318 = vmatpush1.msra.mxu0 0.0
        %319 = vmatprep.subr.mxu0 0.0
        %320 = vmatpush1.msra.mxu0 0.0
        %321 = vmatprep.subr.mxu0 0.0
        %322 = vmatpush1.msra.mxu0 0.0
        %323 = vmatprep.subr.mxu0 0.0
        %324 = vmatpush1.msra.mxu0 0.0
        %325 = vmatprep.subr.mxu0 0.0
        %326 = vmatpush1.msra.mxu0 0.0
        %327 = vmatprep.subr.mxu0 0.0
        %328 = vmatpush1.msra.mxu0 0.0
        %329 = vmatprep.subr.mxu0 0.0
        %330 = vmatpush1.msra.mxu0 0.0
        %331 = vmatprep.subr.mxu0 0.0
        %332 = vmatpush1.msra.mxu0 0.0
        %333 = vmatprep.subr.mxu0 0.0
        %334 = vmatpush1.msra.mxu0 0.0
        %335 = vmatprep.subr.mxu0 0.0
        %336 = vmatpush1.msra.mxu0 0.0
        %337 = vmatprep.subr.mxu0 0.0
        %338 = vmatpush1.msra.mxu0 0.0
        %339 = vmatprep.subr.mxu0 0.0
        %340 = vmatpush1.msra.mxu0 0.0
        %341 = vmatprep.subr.mxu0 0.0
        %342 = vmatpush1.msra.mxu0 0.0
        %343 = vmatprep.subr.mxu0 0.0
        %344 = vmatpush1.msra.mxu0 0.0
        %345 = vmatprep.subr.mxu0 0.0
        %346 = vmatpush1.msra.mxu0 0.0
        %347 = vmatprep.subr.mxu0 0.0
        %348 = vmatpush1.msra.mxu0 0.0
        %349 = vmatprep.subr.mxu0 0.0
        %350 = vmatpush1.msra.mxu0 0.0
        %351 = vmatprep.subr.mxu0 0.0
        %352 = vmatpush1.msra.mxu0 0.0
        %353 = vmatprep.subr.mxu0 0.0
        %354 = vmatpush1.msra.mxu0 0.0
        %355 = vmatprep.subr.mxu0 0.0
        %356 = vmatpush1.msra.mxu0 0.0
        %357 = vmatprep.subr.mxu0 0.0
        %358 = vmatpush1.msra.mxu0 0.0
        %359 = vmatprep.subr.mxu0 0.0
        %360 = vmatpush1.msra.mxu0 0.0
        %361 = vmatprep.mubr.f32.mxu0 0.0
        %362 = vmatmul.mubr.f32.gmra.mrb[0].mxu0 %v292
        %v363 = vpop.f32.mrb[0].mxu0
        %v364 = vadd.f32 0.0, %v363
        %v365 = vpop.f32.mrb[0].mxu0
        %366 = vdwg.mxu0
        %v368 = vsel %vm290, %v284, 0
        %v370 = vsel %vm294, %v283, 0
        %372 = vmatprep.subr.mxu0 0.0
        %373 = vmatpush1.msra.mxu0 %v370
        %374 = vmatprep.subr.mxu0 0.0
        %375 = vmatpush1.msra.mxu0 0.0
        %376 = vmatprep.subr.mxu0 0.0
        %377 = vmatpush1.msra.mxu0 0.0
        %378 = vmatprep.subr.mxu0 0.0
        %379 = vmatpush1.msra.mxu0 0.0
        %380 = vmatprep.subr.mxu0 0.0
        %381 = vmatpush1.msra.mxu0 0.0
        %382 = vmatprep.subr.mxu0 0.0
        %383 = vmatpush1.msra.mxu0 0.0
        %384 = vmatprep.subr.mxu0 0.0
        %385 = vmatpush1.msra.mxu0 0.0
        %386 = vmatprep.subr.mxu0 0.0
        %387 = vmatpush1.msra.mxu0 0.0
        %388 = vmatprep.subr.mxu0 0.0
        %389 = vmatpush1.msra.mxu0 0.0
        %390 = vmatprep.subr.mxu0 0.0
        %391 = vmatpush1.msra.mxu0 0.0
        %392 = vmatprep.subr.mxu0 0.0
        %393 = vmatpush1.msra.mxu0 0.0
        %394 = vmatprep.subr.mxu0 0.0
        %395 = vmatpush1.msra.mxu0 0.0
        %396 = vmatprep.subr.mxu0 0.0
        %397 = vmatpush1.msra.mxu0 0.0
        %398 = vmatprep.subr.mxu0 0.0
        %399 = vmatpush1.msra.mxu0 0.0
        %400 = vmatprep.subr.mxu0 0.0
        %401 = vmatpush1.msra.mxu0 0.0
        %402 = vmatprep.subr.mxu0 0.0
        %403 = vmatpush1.msra.mxu0 0.0
        %404 = vmatprep.subr.mxu0 0.0
        %405 = vmatpush1.msra.mxu0 0.0
        %406 = vmatprep.subr.mxu0 0.0
        %407 = vmatpush1.msra.mxu0 0.0
        %408 = vmatprep.subr.mxu0 0.0
        %409 = vmatpush1.msra.mxu0 0.0
        %410 = vmatprep.subr.mxu0 0.0
        %411 = vmatpush1.msra.mxu0 0.0
        %412 = vmatprep.subr.mxu0 0.0
        %413 = vmatpush1.msra.mxu0 0.0
        %414 = vmatprep.subr.mxu0 0.0
        %415 = vmatpush1.msra.mxu0 0.0
        %416 = vmatprep.subr.mxu0 0.0
        %417 = vmatpush1.msra.mxu0 0.0
        %418 = vmatprep.subr.mxu0 0.0
        %419 = vmatpush1.msra.mxu0 0.0
        %420 = vmatprep.subr.mxu0 0.0
        %421 = vmatpush1.msra.mxu0 0.0
        %422 = vmatprep.subr.mxu0 0.0
        %423 = vmatpush1.msra.mxu0 0.0
        %424 = vmatprep.subr.mxu0 0.0
        %425 = vmatpush1.msra.mxu0 0.0
        %426 = vmatprep.subr.mxu0 0.0
        %427 = vmatpush1.msra.mxu0 0.0
        %428 = vmatprep.subr.mxu0 0.0
        %429 = vmatpush1.msra.mxu0 0.0
        %430 = vmatprep.subr.mxu0 0.0
        %431 = vmatpush1.msra.mxu0 0.0
        %432 = vmatprep.subr.mxu0 0.0
        %433 = vmatpush1.msra.mxu0 0.0
        %434 = vmatprep.subr.mxu0 0.0
        %435 = vmatpush1.msra.mxu0 0.0
        %436 = vmatprep.mubr.f32.mxu0 0.0
        %437 = vmatmul.mubr.f32.gmra.mrb[0].mxu0 %v368
        %v438 = vpop.f32.mrb[0].mxu0
        %v439 = vadd.f32 %v364, %v438
        %v440 = vpop.f32.mrb[0].mxu0
        %441 = vdwg.mxu0
        %v442 = vld [vmem:[%s2] sm:$0xff]
        %444 = vset.pattern.permute.xlu0 0
        %445 = vperm.xlu0 %444, %v442
        %v446 = vpop.permute.xlu0 %445
        %v448 = vadd.f32 %v439, %v446
        %v449 = vmax.f32 %v448, 0.0
        %vm450 = vcmask 7168
        %451 = vst.msk [vmem:[#allocation3] sm:$0xff] %vm450, 0.0
        %453 = vrot.lane.b32.xlu0 %v449, 1
        %v454 = vpop.permute.xlu0 %453
        %vm456 = vcmask 138248
        %457 = vst.msk [vmem:[#allocation3] sm:$0xff] %vm456, %v454
        %v458 = vld [vmem:[#allocation3] sm:$0xff]
        %v459 = vld [vmem:[%s3] sm:$0xff]
        %s460 = scalar_lea.vmem %s3, 8
        %v461 = vld [vmem:[%s460] sm:$0xff]
        %463 = vrot.lane.b32.xlu0 %v458, 127
        %v464 = vpop.permute.xlu0 %463
        %vm466 = vcmask 64512
        %v468 = vsel %vm466, %v461, 0
        %470 = vmatprep.subr.mxu0 0.0
        %471 = vmatpush1.msra.mxu0 %v464
        %472 = vmatprep.subr.mxu0 0.0
        %473 = vmatpush1.msra.mxu0 0.0
        %474 = vmatprep.subr.mxu0 0.0
        %475 = vmatpush1.msra.mxu0 0.0
        %476 = vmatprep.subr.mxu0 0.0
        %477 = vmatpush1.msra.mxu0 0.0
        %478 = vmatprep.subr.mxu0 0.0
        %479 = vmatpush1.msra.mxu0 0.0
        %480 = vmatprep.subr.mxu0 0.0
        %481 = vmatpush1.msra.mxu0 0.0
        %482 = vmatprep.subr.mxu0 0.0
        %483 = vmatpush1.msra.mxu0 0.0
        %484 = vmatprep.subr.mxu0 0.0
        %485 = vmatpush1.msra.mxu0 0.0
        %486 = vmatprep.subr.mxu0 0.0
        %487 = vmatpush1.msra.mxu0 0.0
        %488 = vmatprep.subr.mxu0 0.0
        %489 = vmatpush1.msra.mxu0 0.0
        %490 = vmatprep.subr.mxu0 0.0
        %491 = vmatpush1.msra.mxu0 0.0
        %492 = vmatprep.subr.mxu0 0.0
        %493 = vmatpush1.msra.mxu0 0.0
        %494 = vmatprep.subr.mxu0 0.0
        %495 = vmatpush1.msra.mxu0 0.0
        %496 = vmatprep.subr.mxu0 0.0
        %497 = vmatpush1.msra.mxu0 0.0
        %498 = vmatprep.subr.mxu0 0.0
        %499 = vmatpush1.msra.mxu0 0.0
        %500 = vmatprep.subr.mxu0 0.0
        %501 = vmatpush1.msra.mxu0 0.0
        %502 = vmatprep.subr.mxu0 0.0
        %503 = vmatpush1.msra.mxu0 0.0
        %504 = vmatprep.subr.mxu0 0.0
        %505 = vmatpush1.msra.mxu0 0.0
        %506 = vmatprep.subr.mxu0 0.0
        %507 = vmatpush1.msra.mxu0 0.0
        %508 = vmatprep.subr.mxu0 0.0
        %509 = vmatpush1.msra.mxu0 0.0
        %510 = vmatprep.subr.mxu0 0.0
        %511 = vmatpush1.msra.mxu0 0.0
        %512 = vmatprep.subr.mxu0 0.0
        %513 = vmatpush1.msra.mxu0 0.0
        %514 = vmatprep.subr.mxu0 0.0
        %515 = vmatpush1.msra.mxu0 0.0
        %516 = vmatprep.subr.mxu0 0.0
        %517 = vmatpush1.msra.mxu0 0.0
        %518 = vmatprep.subr.mxu0 0.0
        %519 = vmatpush1.msra.mxu0 0.0
        %520 = vmatprep.subr.mxu0 0.0
        %521 = vmatpush1.msra.mxu0 0.0
        %522 = vmatprep.subr.mxu0 0.0
        %523 = vmatpush1.msra.mxu0 0.0
        %524 = vmatprep.subr.mxu0 0.0
        %525 = vmatpush1.msra.mxu0 0.0
        %526 = vmatprep.subr.mxu0 0.0
        %527 = vmatpush1.msra.mxu0 0.0
        %528 = vmatprep.subr.mxu0 0.0
        %529 = vmatpush1.msra.mxu0 0.0
        %530 = vmatprep.subr.mxu0 0.0
        %531 = vmatpush1.msra.mxu0 0.0
        %532 = vmatprep.subr.mxu0 0.0
        %533 = vmatpush1.msra.mxu0 0.0
        %534 = vmatprep.mubr.f32.mxu0 0.0
        %535 = vmatmul.mubr.f32.gmra.mrb[0].mxu0 %v468
        %v536 = vpop.f32.mrb[0].mxu0
        %v537 = vadd.f32 0.0, %v536
        %v538 = vpop.f32.mrb[0].mxu0
        %539 = vdwg.mxu0
        %v541 = vsel %vm466, %v459, 0
        %543 = vmatprep.subr.mxu0 0.0
        %544 = vmatpush1.msra.mxu0 %v458
        %545 = vmatprep.subr.mxu0 0.0
        %546 = vmatpush1.msra.mxu0 0.0
        %547 = vmatprep.subr.mxu0 0.0
        %548 = vmatpush1.msra.mxu0 0.0
        %549 = vmatprep.subr.mxu0 0.0
        %550 = vmatpush1.msra.mxu0 0.0
        %551 = vmatprep.subr.mxu0 0.0
        %552 = vmatpush1.msra.mxu0 0.0
        %553 = vmatprep.subr.mxu0 0.0
        %554 = vmatpush1.msra.mxu0 0.0
        %555 = vmatprep.subr.mxu0 0.0
        %556 = vmatpush1.msra.mxu0 0.0
        %557 = vmatprep.subr.mxu0 0.0
        %558 = vmatpush1.msra.mxu0 0.0
        %559 = vmatprep.subr.mxu0 0.0
        %560 = vmatpush1.msra.mxu0 0.0
        %561 = vmatprep.subr.mxu0 0.0
        %562 = vmatpush1.msra.mxu0 0.0
        %563 = vmatprep.subr.mxu0 0.0
        %564 = vmatpush1.msra.mxu0 0.0
        %565 = vmatprep.subr.mxu0 0.0
        %566 = vmatpush1.msra.mxu0 0.0
        %567 = vmatprep.subr.mxu0 0.0
        %568 = vmatpush1.msra.mxu0 0.0
        %569 = vmatprep.subr.mxu0 0.0
        %570 = vmatpush1.msra.mxu0 0.0
        %571 = vmatprep.subr.mxu0 0.0
        %572 = vmatpush1.msra.mxu0 0.0
        %573 = vmatprep.subr.mxu0 0.0
        %574 = vmatpush1.msra.mxu0 0.0
        %575 = vmatprep.subr.mxu0 0.0
        %576 = vmatpush1.msra.mxu0 0.0
        %577 = vmatprep.subr.mxu0 0.0
        %578 = vmatpush1.msra.mxu0 0.0
        %579 = vmatprep.subr.mxu0 0.0
        %580 = vmatpush1.msra.mxu0 0.0
        %581 = vmatprep.subr.mxu0 0.0
        %582 = vmatpush1.msra.mxu0 0.0
        %583 = vmatprep.subr.mxu0 0.0
        %584 = vmatpush1.msra.mxu0 0.0
        %585 = vmatprep.subr.mxu0 0.0
        %586 = vmatpush1.msra.mxu0 0.0
        %587 = vmatprep.subr.mxu0 0.0
        %588 = vmatpush1.msra.mxu0 0.0
        %589 = vmatprep.subr.mxu0 0.0
        %590 = vmatpush1.msra.mxu0 0.0
        %591 = vmatprep.subr.mxu0 0.0
        %592 = vmatpush1.msra.mxu0 0.0
        %593 = vmatprep.subr.mxu0 0.0
        %594 = vmatpush1.msra.mxu0 0.0
        %595 = vmatprep.subr.mxu0 0.0
        %596 = vmatpush1.msra.mxu0 0.0
        %597 = vmatprep.subr.mxu0 0.0
        %598 = vmatpush1.msra.mxu0 0.0
        %599 = vmatprep.subr.mxu0 0.0
        %600 = vmatpush1.msra.mxu0 0.0
        %601 = vmatprep.subr.mxu0 0.0
        %602 = vmatpush1.msra.mxu0 0.0
        %603 = vmatprep.subr.mxu0 0.0
        %604 = vmatpush1.msra.mxu0 0.0
        %605 = vmatprep.subr.mxu0 0.0
        %606 = vmatpush1.msra.mxu0 0.0
        %607 = vmatprep.mubr.f32.mxu0 0.0
        %608 = vmatmul.mubr.f32.gmra.mrb[0].mxu0 %v541
        %v609 = vpop.f32.mrb[0].mxu0
        %v610 = vadd.f32 %v537, %v609
        %v611 = vpop.f32.mrb[0].mxu0
        %612 = vdwg.mxu0
        %v613 = vld [vmem:[%s4] sm:$0xff]
        %615 = vset.pattern.permute.xlu0 0
        %616 = vperm.xlu0 %615, %v613
        %v617 = vpop.permute.xlu0 %616
        %v619 = vadd.f32 %v610, %v617
        %v620 = vmax.f32 %v619, 0.0
        %v621 = vld [vmem:[%s5] sm:$0xff]
        %v622 = vld [vmem:[%s273] sm:$0xf]
        %v623 = vld [vmem:[%s6] sm:$0xff]
        %625 = vset.pattern.permute.xlu0 0
        %626 = vperm.xlu0 %625, %v623
        %v627 = vpop.permute.xlu0 %626
        %v630 = vsel %vm290, %v621, 0
        %v633 = vsel %vm294, %v622, 0
        %635 = vmatprep.subr.mxu0 0.0
        %636 = vmatpush1.msra.mxu0 %v633
        %637 = vmatprep.subr.mxu0 0.0
        %638 = vmatpush1.msra.mxu0 0.0
        %639 = vmatprep.subr.mxu0 0.0
        %640 = vmatpush1.msra.mxu0 0.0
        %641 = vmatprep.subr.mxu0 0.0
        %642 = vmatpush1.msra.mxu0 0.0
        %643 = vmatprep.subr.mxu0 0.0
        %644 = vmatpush1.msra.mxu0 0.0
        %645 = vmatprep.subr.mxu0 0.0
        %646 = vmatpush1.msra.mxu0 0.0
        %647 = vmatprep.subr.mxu0 0.0
        %648 = vmatpush1.msra.mxu0 0.0
        %649 = vmatprep.subr.mxu0 0.0
        %650 = vmatpush1.msra.mxu0 0.0
        %651 = vmatprep.subr.mxu0 0.0
        %652 = vmatpush1.msra.mxu0 0.0
        %653 = vmatprep.subr.mxu0 0.0
        %654 = vmatpush1.msra.mxu0 0.0
        %655 = vmatprep.subr.mxu0 0.0
        %656 = vmatpush1.msra.mxu0 0.0
        %657 = vmatprep.subr.mxu0 0.0
        %658 = vmatpush1.msra.mxu0 0.0
        %659 = vmatprep.subr.mxu0 0.0
        %660 = vmatpush1.msra.mxu0 0.0
        %661 = vmatprep.subr.mxu0 0.0
        %662 = vmatpush1.msra.mxu0 0.0
        %663 = vmatprep.subr.mxu0 0.0
        %664 = vmatpush1.msra.mxu0 0.0
        %665 = vmatprep.subr.mxu0 0.0
        %666 = vmatpush1.msra.mxu0 0.0
        %667 = vmatprep.subr.mxu0 0.0
        %668 = vmatpush1.msra.mxu0 0.0
        %669 = vmatprep.subr.mxu0 0.0
        %670 = vmatpush1.msra.mxu0 0.0
        %671 = vmatprep.subr.mxu0 0.0
        %672 = vmatpush1.msra.mxu0 0.0
        %673 = vmatprep.subr.mxu0 0.0
        %674 = vmatpush1.msra.mxu0 0.0
        %675 = vmatprep.subr.mxu0 0.0
        %676 = vmatpush1.msra.mxu0 0.0
        %677 = vmatprep.subr.mxu0 0.0
        %678 = vmatpush1.msra.mxu0 0.0
        %679 = vmatprep.subr.mxu0 0.0
        %680 = vmatpush1.msra.mxu0 0.0
        %681 = vmatprep.subr.mxu0 0.0
        %682 = vmatpush1.msra.mxu0 0.0
        %683 = vmatprep.subr.mxu0 0.0
        %684 = vmatpush1.msra.mxu0 0.0
        %685 = vmatprep.subr.mxu0 0.0
        %686 = vmatpush1.msra.mxu0 0.0
        %687 = vmatprep.subr.mxu0 0.0
        %688 = vmatpush1.msra.mxu0 0.0
        %689 = vmatprep.subr.mxu0 0.0
        %690 = vmatpush1.msra.mxu0 0.0
        %691 = vmatprep.subr.mxu0 0.0
        %692 = vmatpush1.msra.mxu0 0.0
        %693 = vmatprep.subr.mxu0 0.0
        %694 = vmatpush1.msra.mxu0 0.0
        %695 = vmatprep.subr.mxu0 0.0
        %696 = vmatpush1.msra.mxu0 0.0
        %697 = vmatprep.subr.mxu0 0.0
        %698 = vmatpush1.msra.mxu0 0.0
        %699 = vmatprep.mubr.f32.mxu0 0.0
        %700 = vmatmul.mubr.f32.gmra.mrb[0].mxu0 %v630
        %v701 = vpop.f32.mrb[0].mxu0
        %v702 = vadd.f32 %v627, %v701
        %v703 = vpop.f32.mrb[0].mxu0
        %704 = vdwg.mxu0
        %v705 = vadd.f32 %v620, %v702
        %v706 = vmax.f32 %v705, 0.0
        %vm707 = vcmask 130048
        %708 = vst.msk [vmem:[%s269] sm:$0xff] %vm707, %v706
        %s709 = sand.u32 %s181, 1
        %s710 = scalar_lea.sflag [#allocation5], %s709
        %s711 = sand.u32 %s181, 1
        %s712 = smul.addr %s711, 8
        %s713 = scalar_lea.vmem [#allocation4], %s712
        // Predicated region
        $region49: #{tpu_custom_call.1} parent=47 // pred_check
          %p714 = pneg %p191
        $region50: #{tpu_custom_call.1} parent=47 // pred_check_branch
          %716 = sbr.rel (%p714) target = $region52
        $region51: #{tpu_custom_call.1} parent=47 // pred_region
          %s718 = ssub.s32 128, 128
          %719 = vsyncadd %s710, %s718
          %s720 = smul.addr %s21, 128
          %s721 = scalar_lea.hbm %s7, %s720
          %s723 = sshll.u32 %s713, 4
          %s724 = int_to_ptr.vmem [resolvable:$true] %s723
          %726 = dma.vmem_to_hbm [thread:$0]  %s724, 128, %s721, %s710
        $region52: #{tpu_custom_call.1} parent=47 // pred_fallthru
          _
      $region48: #{tpu_custom_call.1} parent=5 // pred_fallthru
        _
      %p727 = scmp.le.s32.totalorder 2, %s16
      // Predicated region
      $region53: #{tpu_custom_call.1} parent=5 // pred_check
        %p728 = pneg %p727
      $region54: #{tpu_custom_call.1} parent=5 // pred_check_branch
        %730 = sbr.rel (%p728) target = $region56
      $region55: #{tpu_custom_call.1} parent=5 // pred_region
        %s731 = ssub.s32 %s16, 2
        // Predicated region
        $region57: #{tpu_custom_call.1} parent=55 // pred_check
          %p732 = pneg %p197
        $region58: #{tpu_custom_call.1} parent=55 // pred_check_branch
          %734 = sbr.rel (%p732) target = $region60
        $region59: #{tpu_custom_call.1} parent=55 // pred_region
          %s735 = sand.u32 %s182, 1
          %s736 = scalar_lea.sflag [#allocation5], %s735
          %s737 = sand.u32 %s182, 1
          %s738 = smul.addr %s737, 8
          %s739 = scalar_lea.vmem [#allocation4], %s738
          %740 = dma.done %s736, 128
        $region60: #{tpu_custom_call.1} parent=55 // pred_fallthru
          _
      $region56: #{tpu_custom_call.1} parent=5 // pred_fallthru
        _
    $region6: #{tpu_custom_call.1} parent=1 // loop_footer
      %s20 = sadd.s32 1, %s16
    $region7: #{tpu_custom_call.1} parent=1 // loop_footer_branch
      %15 = sbr.rel target = $region3
    $region8: #{tpu_custom_call.1} parent=1 // loop_exit
      _
    %741 = vsyncpa [#allocation5], 1
    %s742 = scalar_lea.sflag [#allocation5], 1
    %743 = vsyncpa %s742, 1

</llo_original>
